<compile_context>
chip_gen: v6e
topology: v6e:2x2x1
jax: 0.10.0
libtpu: 0.0.40
codegen_flags: <defaults>
</compile_context>

<pallas_src>
import jax
import jax.numpy as jnp
from jax.experimental import pallas as pl
from jax.experimental.pallas import tpu as pltpu


def _sqrt_kernel(x_ref, o_ref):
    o_ref[...] = jnp.sqrt(x_ref[...])


# Lane-dense last-dim candidates (all multiples of 128), largest first.
_LANE_CANDIDATES = (8192, 4096, 2048, 1024, 512, 256, 128)


def _round_up(n: int, m: int) -> int:
    return -(-n // m) * m


def _tile_bytes_for_device() -> int:
    """Generation-aware per-buffer tile target in bytes."""
    try:
        kind = jax.devices()[0].device_kind.lower()
    except Exception:
        kind = ""
    if "v5 lite" in kind or "v5e" in kind or "v5lite" in kind:
        # v5e: 16 MiB scoped VMEM default -> 3 MiB x 2 arrays x 2 buffers = 12 MiB.
        return 3 << 20
    # v6e / v7x (and default): 6 MiB x 2 arrays x 2 buffers = 24 MiB, inside the
    # 32 MiB scoped default on both; per-step overhead drops to a few percent.
    return 6 << 20


def _pallas_sqrt_2d(flat: jax.Array, rows: int, lane: int, dtype) -> jax.Array:
    """sqrt over a flat array viewed as (rows, lane); returns flat result."""
    itemsize = jnp.dtype(dtype).itemsize
    # Sublane multiple by dtype packing: 8 (f32), 16 (bf16/f16), 32 (int8/fp8).
    sub = max(8, 32 // itemsize)
    tile_bytes = _tile_bytes_for_device()

    tile_rows = max(sub, (tile_bytes // (lane * itemsize)) // sub * sub)
    if rows <= tile_rows:
        if rows >= 2 * sub:
            # Keep >= 2 grid steps so both v7x TensorCores stream and
            # double-buffering does not collapse.
            tile_rows = _round_up(pl.cdiv(rows, 2), sub)
        else:
            # Tiny input: single full-extent block (always a legal block shape).
            tile_rows = rows

    grid = (pl.cdiv(rows, tile_rows),)
    # VMEM budget: 2 arrays x 2 pipeline buffers x tile + headroom.
    vmem_limit = int(4 * tile_rows * lane * itemsize) + (4 << 20)

    total = rows * lane
    out2d = pl.pallas_call(
        _sqrt_kernel,
        out_shape=jax.ShapeDtypeStruct((rows, lane), dtype),
        grid=grid,
        in_specs=[pl.BlockSpec((tile_rows, lane), lambda i: (i, 0))],
        out_specs=pl.BlockSpec((tile_rows, lane), lambda i: (i, 0)),
        compiler_params=pltpu.CompilerParams(
            dimension_semantics=("parallel",),
            vmem_limit_bytes=vmem_limit,
        ),
        cost_estimate=pl.CostEstimate(
            flops=total,
            transcendentals=total,
            bytes_accessed=2 * total * itemsize,
        ),
    )(flat.reshape(rows, lane))
    return out2d.reshape(-1)


@jax.jit
def pallas_sqrt(x: jax.Array) -> jax.Array:
    """Elementwise sqrt via a Pallas TPU kernel. Matches torch.sqrt semantics."""
    orig_shape = x.shape

    # torch.sqrt promotes integer/bool inputs to float32.
    if not jnp.issubdtype(x.dtype, jnp.floating):
        x = x.astype(jnp.float32)
    dtype = x.dtype

    total = x.size
    if total == 0:
        return x.reshape(orig_shape)

    flat = x.reshape(-1)

    # Pick the largest lane-dense width that divides the element count: no
    # padding pass, every store is a full unmasked vst.
    lane = next((l for l in _LANE_CANDIDATES if total % l == 0), None)
    if lane is not None:
        out_flat = _pallas_sqrt_2d(flat, total // lane, lane, dtype)
        return out_flat.reshape(orig_shape)

    # Rare ragged case (total not a multiple of 128): run the aligned head
    # through the kernel and the <128-element tail through plain jnp.sqrt —
    # far cheaper than a full-array pad + slice (two extra HBM passes).
    main = (total // 128) * 128
    if main == 0:
        return jnp.sqrt(flat).reshape(orig_shape)  # sub-128-element input
    head = _pallas_sqrt_2d(flat[:main], main // 128, 128, dtype)
    tail = jnp.sqrt(flat[main:])
    return jnp.concatenate([head, tail]).reshape(orig_shape)


if __name__ == "__main__":
    key = jax.random.PRNGKey(0)
    # Small NCHW-like input, non-negative values so sqrt is well-defined
    # (torch.sqrt gives NaN for negatives; jnp.sqrt matches that behavior).
    x = jax.random.uniform(key, (2, 4, 16, 16), dtype=jnp.float32)

    y = pallas_sqrt(x)
    jax.block_until_ready(y)

    # Sanity check against reference.
    y_ref = jnp.sqrt(x)
    assert y.shape == x.shape and y.dtype == y_ref.dtype
    assert jnp.allclose(y, y_ref, atol=1e-6, rtol=1e-6)

    print("KERNEL_OK")
</pallas_src>

<mosaic_0001>
module attributes {stable_mosaic.version = 11 : i64} {
  func.func @_sqrt_kernel(%arg0: i32, %arg1: memref<1x2048xf32, #tpu.memory_space<vmem>>, %arg2: memref<1x2048xf32, #tpu.memory_space<vmem>>) attributes {dimension_semantics = [#tpu.dimension_semantics<parallel>], iteration_bounds = array<i64: 1>, scalar_prefetch = 0 : i64, scratch_operands = 0 : i64, tpu.core_type = #tpu.core_type<tc>, window_params = [{transform_indices = @transform_0, window_bounds = array<i64: 1, 2048>}, {transform_indices = @transform_1, window_bounds = array<i64: 1, 2048>}]} {
    %c0 = arith.constant 0 : index
    %c0_0 = arith.constant 0 : index
    %0 = vector.load %arg1[%c0, %c0_0] : memref<1x2048xf32, #tpu.memory_space<vmem>>, vector<1x2048xf32>
    %1 = math.sqrt %0 : vector<1x2048xf32>
    %c0_1 = arith.constant 0 : index
    %c0_2 = arith.constant 0 : index
    %2 = vector.load %arg2[%c0_1, %c0_2] : memref<1x2048xf32, #tpu.memory_space<vmem>>, vector<1x2048xf32>
    tpu.vector_store %arg2[%c0_1, %c0_2], %1 {strides = array<i32>} : memref<1x2048xf32, #tpu.memory_space<vmem>>, vector<1x2048xf32>,
    return
  }
  func.func @transform_0(%arg0: i32) -> (i32, i32) {
    %c0_i32 = arith.constant 0 : i32
    %c0_i32_0 = arith.constant 0 : i32
    return %arg0, %c0_i32 : i32, i32
  }
  func.func @transform_1(%arg0: i32) -> (i32, i32) {
    %c0_i32 = arith.constant 0 : i32
    %c0_i32_0 = arith.constant 0 : i32
    return %arg0, %c0_i32 : i32, i32
  }
}

</mosaic_0001>

<llo_original>
// kernel: pallas_sqrt.1
$region0: #{pallas_sqrt.1}
  #allocation0 [shape = 'u32[]', space=smem, size = 0x4, offset = 0x4, fixed_abs, tag = 'smem constant byte address 0x4 - core index']
  #allocation1 [shape = 'u32[144,128]{1,0:T(1,128)}', space=vmem, size = 0x12000, scoped, tag = 'internal scratch']
  %s0 = inlined_call_operand.vmem [shape: f32[1,2048], index: 0, kind: input, shape index: {}]
  %s1 = inlined_call_operand.vmem [shape: f32[1,2048], index: 1, kind: output, shape index: {}]
  %s2 = sld [smem:[#allocation0]]
  $region14: #{pallas_sqrt.1} parent=0
    _
  %s4 = ssub.s32 1, %s2
  %s5 = scalar_select 0, %s4, %s2
  // Predicated region
  $region2: #{pallas_sqrt.1} parent=0 // pred_check
    _
  $region3: #{pallas_sqrt.1} parent=0 // pred_check_branch
    %7 = sbr.rel (0) target = $region5
  $region4: #{pallas_sqrt.1} parent=0 // pred_region
    _
  $region5: #{pallas_sqrt.1} parent=0 // pred_fallthru
    _
  %v8 = vld [vmem:[%s0] sm:$0xff]
  %v9 = vld [vmem:[%s0 + $0x8] sm:$0xff]
  %v10 = vrsqrt.pop %v8
  %v11 = vmul.f32 %v8, %v10
  %vm12 = vcmp.eq.f32.partialorder %v8, inf
  %v13 = vsel %vm12, %v8, %v11
  %vm14 = vcmp.eq.f32.partialorder %v8, 0.0
  %v15 = vand.u32 %v8, 2147483648
  %v16 = vsel %vm14, %v15, %v13
  %v17 = vrsqrt.pop %v9
  %v18 = vmul.f32 %v9, %v17
  %vm19 = vcmp.eq.f32.partialorder %v9, inf
  %v20 = vsel %vm19, %v9, %v18
  %vm21 = vcmp.eq.f32.partialorder %v9, 0.0
  %v22 = vand.u32 %v9, 2147483648
  %v23 = vsel %vm21, %v22, %v20
  %24 = vst [vmem:[%s1] sm:$0xff] %v16
  %25 = vst [vmem:[%s1 + $0x8] sm:$0xff] %v23
  // Predicated region
  $region6: #{pallas_sqrt.1} parent=0 // pred_check
    _
  $region7: #{pallas_sqrt.1} parent=0 // pred_check_branch
    %27 = sbr.rel (0) target = $region9
  $region8: #{pallas_sqrt.1} parent=0 // pred_region
    _
  $region9: #{pallas_sqrt.1} parent=0 // pred_fallthru
    _
  // Predicated region
  $region10: #{pallas_sqrt.1} parent=0 // pred_check
    _
  $region11: #{pallas_sqrt.1} parent=0 // pred_check_branch
    %29 = sbr.rel (0) target = $region13
  $region12: #{pallas_sqrt.1} parent=0 // pred_region
    _
  $region13: #{pallas_sqrt.1} parent=0 // pred_fallthru
    _

</llo_original>
